<compile_context>
chip_gen: v6e
topology: v6e:2x2x1
jax: 0.10.0
libtpu: 0.0.40
codegen_flags: <defaults>
</compile_context>

<pallas_src>
import functools

import jax
import jax.numpy as jnp
from jax import lax
from jax.experimental import pallas as pl
from jax.experimental.pallas import tpu as pltpu


def _round_up(x, m):
    return ((x + m - 1) // m) * m


def _layernorm(x, gamma, beta, eps=1e-5):
    mu = jnp.mean(x, axis=-1, keepdims=True)
    var = jnp.mean(jnp.square(x - mu), axis=-1, keepdims=True)
    return (x - mu) * lax.rsqrt(var + eps) * gamma + beta


# ---------------------------------------------------------------------------
# Kernel A: context-side (N-invariant) work, executed once.
# ---------------------------------------------------------------------------
def _ctx_prep_kernel(ctx_ref, g_stored_ref, b_stored_ref, g_proj_ref, b_proj_ref,
                     wk_ref, bk_ref, wv_ref, bv_ref, k_out_ref, v_out_ref):
    ctx = ctx_ref[...].astype(jnp.float32)                        # [M, R]
    k_in = _layernorm(ctx, g_stored_ref[...], b_stored_ref[...])  # stored-pattern LN
    v_in = _layernorm(ctx, g_proj_ref[...], b_proj_ref[...])      # pattern-proj LN

    # Fused (all heads at once) K/V projections: contraction over R, lane-dense
    # [M, H*D] output, bf16 operands with f32 accumulation.
    k_all = jnp.dot(k_in.astype(jnp.bfloat16), wk_ref[...],
                    preferred_element_type=jnp.float32) + bk_ref[...]   # [M, H*D]
    v_all = jnp.dot(v_in.astype(jnp.bfloat16), wv_ref[...],
                    preferred_element_type=jnp.float32) + bv_ref[...]   # [M, H*D]

    k_out_ref[...] = k_all.astype(k_out_ref.dtype)
    v_out_ref[...] = v_all.astype(v_out_ref.dtype)


# ---------------------------------------------------------------------------
# Kernel B: Hopfield retrieval for a tile of N rows of s_flat.
#   kt_ref: [H, D, M]  (K already transposed, one-time, in the wrapper)
#   v_ref : [H, M, D]
# ---------------------------------------------------------------------------
def _context_attn_kernel(s_ref, kt_ref, v_ref, g_state_ref, b_state_ref,
                         wq_ref, bq_ref, wo_ref, bo_ref, out_ref,
                         *, num_heads, head_dim, scaling):
    s = s_ref[...].astype(jnp.float32)                            # [Tn, R]
    q_in = _layernorm(s, g_state_ref[...], b_state_ref[...])      # state-pattern LN

    # Fused Q projection for all heads; beta folded into Q in f32 (touches only
    # [Tn, H*D] instead of the [Tn, M] logits per head).
    q_all = jnp.dot(q_in.astype(jnp.bfloat16), wq_ref[...],
                    preferred_element_type=jnp.float32) + bq_ref[...]   # [Tn, H*D]
    q_all = q_all * scaling

    acc = jnp.zeros_like(s)                                       # [Tn, R] f32
    for h in range(num_heads):  # static, small
        sl = slice(h * head_dim, (h + 1) * head_dim)
        q_h = q_all[:, sl].astype(jnp.bfloat16)                   # [Tn, D]
        # logits = (beta*q_h) @ K_h^T : plain MXU matmul, lane-dense in M.
        logits = jnp.dot(q_h, kt_ref[h],
                         preferred_element_type=jnp.float32)      # [Tn, M]
        logits = logits - jnp.max(logits, axis=-1, keepdims=True)
        p = jnp.exp(logits)                                       # in (0, 1]
        denom = jnp.sum(p, axis=-1, keepdims=True)                # [Tn, 1] f32
        # TODO(synk): Hopfield attention dropout omitted (identity in eval mode).
        o_h = jnp.dot(p.astype(jnp.bfloat16), v_ref[h],
                      preferred_element_type=jnp.float32)         # [Tn, D]
        # Deferred softmax normalization on the small [Tn, D] result (EUP recip).
        o_h = o_h * pl.reciprocal(denom, approx=True)
        # Per-head accumulation into the Wo output (no lane-axis head concat).
        acc = acc + jnp.dot(o_h.astype(jnp.bfloat16), wo_ref[sl, :],
                            preferred_element_type=jnp.float32)   # [Tn, R]

    # Residual: s_updated = s_flat + hopfield(s_flat); bo added once.
    out_ref[...] = (s + acc + bo_ref[...]).astype(out_ref.dtype)


# ---------------------------------------------------------------------------
# BlockSpec helpers
# ---------------------------------------------------------------------------
def _full_spec(x):
    zeros = (0,) * x.ndim

    def imap(i):
        return zeros

    return pl.BlockSpec(x.shape, imap)


def _resident_spec(x):
    # Constant index map + single buffer: the block never changes across the
    # grid, so one VMEM copy is enough (halves resident footprint vs default 2).
    zeros = (0,) * x.ndim

    def imap(i):
        return zeros

    return pl.BlockSpec(x.shape, imap, pipeline_mode=pl.Buffered(1))


# ---------------------------------------------------------------------------
# Wrapper
# ---------------------------------------------------------------------------
def context_module_forward(query_embedding, support_actives_embedding,
                           support_inactives_embedding, context_set_embedding,
                           params, *, num_heads, head_dim, scaling, tile_n=512):
    B, _, R = query_embedding.shape
    na = support_actives_embedding.shape[1]
    s = jnp.concatenate([query_embedding, support_actives_embedding,
                         support_inactives_embedding], axis=1)    # [B, T, R]
    T = s.shape[1]
    N = B * T
    s_flat = s.reshape(N, R)
    ctx = context_set_embedding.reshape(-1, R)                    # [M, R]
    M = ctx.shape[0]
    HD = num_heads * head_dim

    # Weights are stored pre-transposed ("x @ W" layout); bf16 for the MXU path.
    wq = params["wq"].astype(jnp.bfloat16)   # [R, H*D]
    wk = params["wk"].astype(jnp.bfloat16)   # [R, H*D]
    wv = params["wv"].astype(jnp.bfloat16)   # [R, H*D]
    wo = params["wo"].astype(jnp.bfloat16)   # [H*D, R]

    # 48 MiB scoped VMEM: fits inside v7x's 64 MiB/TC physical budget (leaves
    # headroom for compiler scratch) while raising v5e/v6e's 16/32 MiB defaults.
    cparams = pltpu.CompilerParams(
        dimension_semantics=("parallel",),
        vmem_limit_bytes=48 * 1024 * 1024)

    # --- Kernel A: once-only context prep (fused K, V, bf16, lane-dense) ------
    a_ins = (ctx, params["g_stored"], params["b_stored"],
             params["g_proj"], params["b_proj"], wk, params["bk"], wv, params["bv"])
    k_all, v_all = pl.pallas_call(
        _ctx_prep_kernel,
        out_shape=(jax.ShapeDtypeStruct((M, HD), jnp.bfloat16),
                   jax.ShapeDtypeStruct((M, HD), jnp.bfloat16)),
        grid=(1,),
        in_specs=[_full_spec(x) for x in a_ins],
        out_specs=(pl.BlockSpec((M, HD), lambda i: (0, 0)),
                   pl.BlockSpec((M, HD), lambda i: (0, 0))),
        compiler_params=cparams,
    )(*a_ins)

    # One-time, N-invariant relayout so Kernel B never transposes per tile:
    #   K^T as [H, D, M]  (logits = q_h @ K^T, lane-dense in M), V as [H, M, D].
    k_t = jnp.transpose(k_all.reshape(M, num_heads, head_dim), (1, 2, 0))
    v_h = jnp.transpose(v_all.reshape(M, num_heads, head_dim), (1, 0, 2))

    # --- Kernel B: tiled over N, context/weights VMEM-resident ----------------
    n_r = _round_up(N, 8)
    tile = min(tile_n, n_r)                   # multiple of 8 sublanes
    if n_r >= 16:
        # Keep >= 2 grid steps whenever N allows so both v7x TensorCores get
        # work on the "parallel" axis (no-op on single-TC v5e/v6e).
        tile = min(tile, max(8, (n_r // 2) // 8 * 8))
    n_pad = _round_up(N, tile)
    if n_pad != N:
        s_flat = jnp.pad(s_flat, ((0, n_pad - N), (0, 0)))

    b_ins = (s_flat, k_t, v_h,
             params["g_state"], params["b_state"],
             wq, params["bq"], wo, params["bo"])
    in_specs = ([pl.BlockSpec((tile, R), lambda i: (i, 0))]
                + [_resident_spec(x) for x in b_ins[1:]])

    out_flat = pl.pallas_call(
        functools.partial(_context_attn_kernel, num_heads=num_heads,
                          head_dim=head_dim, scaling=scaling),
        out_shape=jax.ShapeDtypeStruct((n_pad, R), s_flat.dtype),
        grid=(n_pad // tile,),
        in_specs=in_specs,
        out_specs=pl.BlockSpec((tile, R), lambda i: (i, 0)),
        compiler_params=cparams,
    )(*b_ins)

    s_updated = out_flat[:N].reshape(B, T, R)
    q_out = s_updated[:, 0:1, :]
    act_out = s_updated[:, 1:na + 1, :]
    inact_out = s_updated[:, na + 1:, :]
    return q_out, act_out, inact_out


# ---------------------------------------------------------------------------
# Params (stored directly in the kernel-friendly, pre-transposed layout:
#   wq/wk/wv = [R, H*D]  (PyTorch per-head W^T concatenated along columns)
#   wo       = [H*D, R]  (PyTorch out_proj.weight^T)
# LayerNorm affine params follow PyTorch init (gamma=1, beta=0).
# ---------------------------------------------------------------------------
def init_params(key, R, num_heads, head_dim):
    keys = jax.random.split(key, 8)
    HD = num_heads * head_dim

    def w(k, shape, scale=0.05):
        return (scale * jax.random.normal(k, shape)).astype(jnp.float32)

    return dict(
        g_state=jnp.ones((1, R), jnp.float32), b_state=jnp.zeros((1, R), jnp.float32),
        g_stored=jnp.ones((1, R), jnp.float32), b_stored=jnp.zeros((1, R), jnp.float32),
        g_proj=jnp.ones((1, R), jnp.float32), b_proj=jnp.zeros((1, R), jnp.float32),
        wq=w(keys[0], (R, HD)), bq=w(keys[1], (1, HD)),
        wk=w(keys[2], (R, HD)), bk=w(keys[3], (1, HD)),
        wv=w(keys[4], (R, HD)), bv=w(keys[5], (1, HD)),
        wo=w(keys[6], (HD, R)), bo=w(keys[7], (1, R)),
    )


def reference_forward(query, act, inact, ctx, params, num_heads, head_dim, scaling):
    """Pure-JAX f32 reference of the same math (sanity check)."""
    s = jnp.concatenate([query, act, inact], axis=1)
    B, T, R = s.shape
    sf = s.reshape(B * T, R)
    c = ctx.reshape(-1, R)

    def ln(x, g, b):
        mu = x.mean(-1, keepdims=True)
        var = ((x - mu) ** 2).mean(-1, keepdims=True)
        return (x - mu) / jnp.sqrt(var + 1e-5) * g + b

    qn = ln(sf, params["g_state"], params["b_state"])
    kn = ln(c, params["g_stored"], params["b_stored"])
    vn = ln(c, params["g_proj"], params["b_proj"])
    q_all = qn @ params["wq"] + params["bq"]
    k_all = kn @ params["wk"] + params["bk"]
    v_all = vn @ params["wv"] + params["bv"]
    heads = []
    for h in range(num_heads):
        sl = slice(h * head_dim, (h + 1) * head_dim)
        a = jax.nn.softmax(scaling * (q_all[:, sl] @ k_all[:, sl].T), axis=-1)
        heads.append(a @ v_all[:, sl])
    out = jnp.concatenate(heads, axis=-1) @ params["wo"] + params["bo"]
    su = (sf + out).reshape(B, T, R)
    na = act.shape[1]
    return su[:, :1], su[:, 1:na + 1], su[:, na + 1:]


if __name__ == "__main__":
    key = jax.random.PRNGKey(0)
    B, NA, NI = 2, 3, 4          # batch, active padding, inactive padding
    R = 64                       # associationSpace_dim (demo size)
    M = 32                       # number of context molecules (demo size)
    H, D = 2, 16                 # hopfield.heads, hopfield.dim_QK
    BETA = 0.125                 # hopfield.beta (scaling)

    k1, k2, k3, k4, k5 = jax.random.split(key, 5)
    query = jax.random.normal(k1, (B, 1, R), jnp.float32)
    actives = jax.random.normal(k2, (B, NA, R), jnp.float32)
    inactives = jax.random.normal(k3, (B, NI, R), jnp.float32)
    context = jax.random.normal(k4, (1, M, R), jnp.float32)
    params = init_params(k5, R, H, D)

    q_out, a_out, i_out = context_module_forward(
        query, actives, inactives, context, params,
        num_heads=H, head_dim=D, scaling=BETA)
    jax.block_until_ready((q_out, a_out, i_out))

    assert q_out.shape == (B, 1, R)
    assert a_out.shape == (B, NA, R)
    assert i_out.shape == (B, NI, R)

    rq, ra, ri = reference_forward(query, actives, inactives, context, params, H, D, BETA)
    for got, ref in ((q_out, rq), (a_out, ra), (i_out, ri)):
        err = float(jnp.max(jnp.abs(got - ref)))
        assert jnp.allclose(got, ref, atol=2e-2, rtol=2e-2), err

    print("KERNEL_OK")
</pallas_src>

<mosaic_0001>
module attributes {stable_mosaic.version = 11 : i64} {
  func.func @_ctx_prep_kernel(%arg0: i32, %arg1: memref<32x64xf32, #tpu.memory_space<vmem>>, %arg2: memref<1x64xf32, #tpu.memory_space<vmem>>, %arg3: memref<1x64xf32, #tpu.memory_space<vmem>>, %arg4: memref<1x64xf32, #tpu.memory_space<vmem>>, %arg5: memref<1x64xf32, #tpu.memory_space<vmem>>, %arg6: memref<64x32xbf16, #tpu.memory_space<vmem>>, %arg7: memref<1x32xf32, #tpu.memory_space<vmem>>, %arg8: memref<64x32xbf16, #tpu.memory_space<vmem>>, %arg9: memref<1x32xf32, #tpu.memory_space<vmem>>, %arg10: memref<32x32xbf16, #tpu.memory_space<vmem>>, %arg11: memref<32x32xbf16, #tpu.memory_space<vmem>>) attributes {dimension_semantics = [#tpu.dimension_semantics<parallel>], iteration_bounds = array<i64: 1>, scalar_prefetch = 0 : i64, scratch_operands = 0 : i64, tpu.core_type = #tpu.core_type<tc>, window_params = [{pipeline_mode = #tpu.pipeline_mode<synchronous>, transform_indices = @transform_0, window_bounds = array<i64: 32, 64>}, {pipeline_mode = #tpu.pipeline_mode<synchronous>, transform_indices = @transform_1, window_bounds = array<i64: 1, 64>}, {pipeline_mode = #tpu.pipeline_mode<synchronous>, transform_indices = @transform_2, window_bounds = array<i64: 1, 64>}, {pipeline_mode = #tpu.pipeline_mode<synchronous>, transform_indices = @transform_3, window_bounds = array<i64: 1, 64>}, {pipeline_mode = #tpu.pipeline_mode<synchronous>, transform_indices = @transform_4, window_bounds = array<i64: 1, 64>}, {pipeline_mode = #tpu.pipeline_mode<synchronous>, transform_indices = @transform_5, window_bounds = array<i64: 64, 32>}, {pipeline_mode = #tpu.pipeline_mode<synchronous>, transform_indices = @transform_6, window_bounds = array<i64: 1, 32>}, {pipeline_mode = #tpu.pipeline_mode<synchronous>, transform_indices = @transform_7, window_bounds = array<i64: 64, 32>}, {pipeline_mode = #tpu.pipeline_mode<synchronous>, transform_indices = @transform_8, window_bounds = array<i64: 1, 32>}, {pipeline_mode = #tpu.pipeline_mode<synchronous>, transform_indices = @transform_9, window_bounds = array<i64: 32, 32>}, {pipeline_mode = #tpu.pipeline_mode<synchronous>, transform_indices = @transform_10, window_bounds = array<i64: 32, 32>}]} {
    %c0 = arith.constant 0 : index
    %c0_0 = arith.constant 0 : index
    %0 = vector.load %arg1[%c0, %c0_0] : memref<32x64xf32, #tpu.memory_space<vmem>>, vector<32x64xf32>
    %c0_1 = arith.constant 0 : index
    %c0_2 = arith.constant 0 : index
    %1 = vector.load %arg2[%c0_1, %c0_2] : memref<1x64xf32, #tpu.memory_space<vmem>>, vector<1x64xf32>
    %c0_3 = arith.constant 0 : index
    %c0_4 = arith.constant 0 : index
    %2 = vector.load %arg3[%c0_3, %c0_4] : memref<1x64xf32, #tpu.memory_space<vmem>>, vector<1x64xf32>
    %cst = arith.constant dense<0.000000e+00> : vector<32xf32>
    %3 = vector.multi_reduction <add>, %0, %cst [1] : vector<32x64xf32> to vector<32xf32>
    %4 = vector.shape_cast %3 : vector<32xf32> to vector<32x1xf32>
    %cst_5 = arith.constant 6.400000e+01 : f32
    %5 = vector.broadcast %cst_5 : f32 to vector<32x1xf32>
    %6 = arith.divf %4, %5 : vector<32x1xf32>
    %7 = vector.broadcast %6 : vector<32x1xf32> to vector<32x64xf32>
    %8 = arith.subf %0, %7 : vector<32x64xf32>
    %9 = arith.mulf %8, %8 : vector<32x64xf32>
    %cst_6 = arith.constant dense<0.000000e+00> : vector<32xf32>
    %10 = vector.multi_reduction <add>, %9, %cst_6 [1] : vector<32x64xf32> to vector<32xf32>
    %11 = vector.shape_cast %10 : vector<32xf32> to vector<32x1xf32>
    %cst_7 = arith.constant 6.400000e+01 : f32
    %12 = vector.broadcast %cst_7 : f32 to vector<32x1xf32>
    %13 = arith.divf %11, %12 : vector<32x1xf32>
    %14 = vector.broadcast %6 : vector<32x1xf32> to vector<32x64xf32>
    %15 = arith.subf %0, %14 : vector<32x64xf32>
    %cst_8 = arith.constant 9.99999974E-6 : f32
    %16 = vector.broadcast %cst_8 : f32 to vector<32x1xf32>
    %17 = arith.addf %13, %16 : vector<32x1xf32>
    %18 = math.rsqrt %17 : vector<32x1xf32>
    %19 = vector.broadcast %18 : vector<32x1xf32> to vector<32x64xf32>
    %20 = arith.mulf %15, %19 : vector<32x64xf32>
    %21 = vector.broadcast %1 : vector<1x64xf32> to vector<32x64xf32>
    %22 = arith.mulf %20, %21 : vector<32x64xf32>
    %23 = vector.broadcast %2 : vector<1x64xf32> to vector<32x64xf32>
    %24 = arith.addf %22, %23 : vector<32x64xf32>
    %c0_9 = arith.constant 0 : index
    %c0_10 = arith.constant 0 : index
    %25 = vector.load %arg4[%c0_9, %c0_10] : memref<1x64xf32, #tpu.memory_space<vmem>>, vector<1x64xf32>
    %c0_11 = arith.constant 0 : index
    %c0_12 = arith.constant 0 : index
    %26 = vector.load %arg5[%c0_11, %c0_12] : memref<1x64xf32, #tpu.memory_space<vmem>>, vector<1x64xf32>
    %cst_13 = arith.constant dense<0.000000e+00> : vector<32xf32>
    %27 = vector.multi_reduction <add>, %0, %cst_13 [1] : vector<32x64xf32> to vector<32xf32>
    %28 = vector.shape_cast %27 : vector<32xf32> to vector<32x1xf32>
    %cst_14 = arith.constant 6.400000e+01 : f32
    %29 = vector.broadcast %cst_14 : f32 to vector<32x1xf32>
    %30 = arith.divf %28, %29 : vector<32x1xf32>
    %31 = vector.broadcast %30 : vector<32x1xf32> to vector<32x64xf32>
    %32 = arith.subf %0, %31 : vector<32x64xf32>
    %33 = arith.mulf %32, %32 : vector<32x64xf32>
    %cst_15 = arith.constant dense<0.000000e+00> : vector<32xf32>
    %34 = vector.multi_reduction <add>, %33, %cst_15 [1] : vector<32x64xf32> to vector<32xf32>
    %35 = vector.shape_cast %34 : vector<32xf32> to vector<32x1xf32>
    %cst_16 = arith.constant 6.400000e+01 : f32
    %36 = vector.broadcast %cst_16 : f32 to vector<32x1xf32>
    %37 = arith.divf %35, %36 : vector<32x1xf32>
    %38 = vector.broadcast %30 : vector<32x1xf32> to vector<32x64xf32>
    %39 = arith.subf %0, %38 : vector<32x64xf32>
    %cst_17 = arith.constant 9.99999974E-6 : f32
    %40 = vector.broadcast %cst_17 : f32 to vector<32x1xf32>
    %41 = arith.addf %37, %40 : vector<32x1xf32>
    %42 = math.rsqrt %41 : vector<32x1xf32>
    %43 = vector.broadcast %42 : vector<32x1xf32> to vector<32x64xf32>
    %44 = arith.mulf %39, %43 : vector<32x64xf32>
    %45 = vector.broadcast %25 : vector<1x64xf32> to vector<32x64xf32>
    %46 = arith.mulf %44, %45 : vector<32x64xf32>
    %47 = vector.broadcast %26 : vector<1x64xf32> to vector<32x64xf32>
    %48 = arith.addf %46, %47 : vector<32x64xf32>
    %49 = arith.truncf %24 : vector<32x64xf32> to vector<32x64xbf16>
    %c0_18 = arith.constant 0 : index
    %c0_19 = arith.constant 0 : index
    %50 = vector.load %arg6[%c0_18, %c0_19] : memref<64x32xbf16, #tpu.memory_space<vmem>>, vector<64x32xbf16>
    %cst_20 = arith.constant dense<0.000000e+00> : vector<32x32xf32>
    %51 = tpu.matmul %49, %50, %cst_20 {dimension_numbers = #tpu.dot_dimension_numbers<[1], [0], [0], [1], [0, 0, 1, 1], [], []>} : vector<32x64xbf16>, vector<64x32xbf16>, vector<32x32xf32> -> vector<32x32xf32>
    %c0_21 = arith.constant 0 : index
    %c0_22 = arith.constant 0 : index
    %52 = vector.load %arg7[%c0_21, %c0_22] : memref<1x32xf32, #tpu.memory_space<vmem>>, vector<1x32xf32>
    %53 = vector.broadcast %52 : vector<1x32xf32> to vector<32x32xf32>
    %54 = arith.addf %51, %53 : vector<32x32xf32>
    %55 = arith.truncf %48 : vector<32x64xf32> to vector<32x64xbf16>
    %c0_23 = arith.constant 0 : index
    %c0_24 = arith.constant 0 : index
    %56 = vector.load %arg8[%c0_23, %c0_24] : memref<64x32xbf16, #tpu.memory_space<vmem>>, vector<64x32xbf16>
    %cst_25 = arith.constant dense<0.000000e+00> : vector<32x32xf32>
    %57 = tpu.matmul %55, %56, %cst_25 {dimension_numbers = #tpu.dot_dimension_numbers<[1], [0], [0], [1], [0, 0, 1, 1], [], []>} : vector<32x64xbf16>, vector<64x32xbf16>, vector<32x32xf32> -> vector<32x32xf32>
    %c0_26 = arith.constant 0 : index
    %c0_27 = arith.constant 0 : index
    %58 = vector.load %arg9[%c0_26, %c0_27] : memref<1x32xf32, #tpu.memory_space<vmem>>, vector<1x32xf32>
    %59 = vector.broadcast %58 : vector<1x32xf32> to vector<32x32xf32>
    %60 = arith.addf %57, %59 : vector<32x32xf32>
    %61 = arith.truncf %54 : vector<32x32xf32> to vector<32x32xbf16>
    %c0_28 = arith.constant 0 : index
    %c0_29 = arith.constant 0 : index
    %62 = vector.load %arg10[%c0_28, %c0_29] : memref<32x32xbf16, #tpu.memory_space<vmem>>, vector<32x32xbf16>
    tpu.vector_store %arg10[%c0_28, %c0_29], %61 {strides = array<i32>} : memref<32x32xbf16, #tpu.memory_space<vmem>>, vector<32x32xbf16>,
    %63 = arith.truncf %60 : vector<32x32xf32> to vector<32x32xbf16>
    %c0_30 = arith.constant 0 : index
    %c0_31 = arith.constant 0 : index
    %64 = vector.load %arg11[%c0_30, %c0_31] : memref<32x32xbf16, #tpu.memory_space<vmem>>, vector<32x32xbf16>
    tpu.vector_store %arg11[%c0_30, %c0_31], %63 {strides = array<i32>} : memref<32x32xbf16, #tpu.memory_space<vmem>>, vector<32x32xbf16>,
    return
  }
  func.func @transform_0(%arg0: i32) -> (i32, i32) {
    %c0_i32 = arith.constant 0 : i32
    %c0_i32_0 = arith.constant 0 : i32
    %c0_i32_1 = arith.constant 0 : i32
    return %c0_i32, %c0_i32_0 : i32, i32
  }
  func.func @transform_1(%arg0: i32) -> (i32, i32) {
    %c0_i32 = arith.constant 0 : i32
    %c0_i32_0 = arith.constant 0 : i32
    %c0_i32_1 = arith.constant 0 : i32
    return %c0_i32, %c0_i32_0 : i32, i32
  }
  func.func @transform_2(%arg0: i32) -> (i32, i32) {
    %c0_i32 = arith.constant 0 : i32
    %c0_i32_0 = arith.constant 0 : i32
    %c0_i32_1 = arith.constant 0 : i32
    return %c0_i32, %c0_i32_0 : i32, i32
  }
  func.func @transform_3(%arg0: i32) -> (i32, i32) {
    %c0_i32 = arith.constant 0 : i32
    %c0_i32_0 = arith.constant 0 : i32
    %c0_i32_1 = arith.constant 0 : i32
    return %c0_i32, %c0_i32_0 : i32, i32
  }
  func.func @transform_4(%arg0: i32) -> (i32, i32) {
    %c0_i32 = arith.constant 0 : i32
    %c0_i32_0 = arith.constant 0 : i32
    %c0_i32_1 = arith.constant 0 : i32
    return %c0_i32, %c0_i32_0 : i32, i32
  }
  func.func @transform_5(%arg0: i32) -> (i32, i32) {
    %c0_i32 = arith.constant 0 : i32
    %c0_i32_0 = arith.constant 0 : i32
    %c0_i32_1 = arith.constant 0 : i32
    return %c0_i32, %c0_i32_0 : i32, i32
  }
  func.func @transform_6(%arg0: i32) -> (i32, i32) {
    %c0_i32 = arith.constant 0 : i32
    %c0_i32_0 = arith.constant 0 : i32
    %c0_i32_1 = arith.constant 0 : i32
    return %c0_i32, %c0_i32_0 : i32, i32
  }
  func.func @transform_7(%arg0: i32) -> (i32, i32) {
    %c0_i32 = arith.constant 0 : i32
    %c0_i32_0 = arith.constant 0 : i32
    %c0_i32_1 = arith.constant 0 : i32
    return %c0_i32, %c0_i32_0 : i32, i32
  }
  func.func @transform_8(%arg0: i32) -> (i32, i32) {
    %c0_i32 = arith.constant 0 : i32
    %c0_i32_0 = arith.constant 0 : i32
    %c0_i32_1 = arith.constant 0 : i32
    return %c0_i32, %c0_i32_0 : i32, i32
  }
  func.func @transform_9(%arg0: i32) -> (i32, i32) {
    %c0_i32 = arith.constant 0 : i32
    %c0_i32_0 = arith.constant 0 : i32
    %c0_i32_1 = arith.constant 0 : i32
    return %c0_i32, %c0_i32_0 : i32, i32
  }
  func.func @transform_10(%arg0: i32) -> (i32, i32) {
    %c0_i32 = arith.constant 0 : i32
    %c0_i32_0 = arith.constant 0 : i32
    %c0_i32_1 = arith.constant 0 : i32
    return %c0_i32, %c0_i32_0 : i32, i32
  }
}

</mosaic_0001>

<llo_original>
// kernel: tpu_custom_call.1
$region0: #{tpu_custom_call.1}
  #allocation0 [shape = 'u32[]', space=smem, size = 0x4, offset = 0x4, fixed_abs, tag = 'smem constant byte address 0x4 - core index']
  #allocation1 [shape = 'u32[144,128]{1,0:T(1,128)}', space=vmem, size = 0x12000, scoped, tag = 'internal scratch']
  %s0 = inlined_call_operand.vmem [shape: f32[32,64], index: 0, kind: input, shape index: {}]
  %s1 = inlined_call_operand.vmem [shape: f32[1,64], index: 1, kind: input, shape index: {}]
  %s2 = inlined_call_operand.vmem [shape: f32[1,64], index: 2, kind: input, shape index: {}]
  %s3 = inlined_call_operand.vmem [shape: f32[1,64], index: 3, kind: input, shape index: {}]
  %s4 = inlined_call_operand.vmem [shape: f32[1,64], index: 4, kind: input, shape index: {}]
  %s5 = inlined_call_operand.vmem [shape: bf16[64,32], index: 5, kind: input, shape index: {}]
  %s6 = inlined_call_operand.vmem [shape: f32[1,32], index: 6, kind: input, shape index: {}]
  %s7 = inlined_call_operand.vmem [shape: bf16[64,32], index: 7, kind: input, shape index: {}]
  %s8 = inlined_call_operand.vmem [shape: f32[1,32], index: 8, kind: input, shape index: {}]
  %s9 = inlined_call_operand.hbm [shape: bf16[32,32], index: 9, kind: output, shape index: {0}]
  %s10 = inlined_call_operand.hbm [shape: bf16[32,32], index: 10, kind: output, shape index: {1}]
  %11 = xla_tuple %s9, %s10
  %s12 = sld [smem:[#allocation0]]
  $region54: #{tpu_custom_call.1} parent=0
    _
  %s14 = ssub.s32 1, %s12
  %s15 = scalar_select 0, %s14, %s12
  $region1: #{tpu_custom_call.1} parent=0
    #allocation2 [shape = 'u8[8192]{0}', space=vmem, size = 0x2000, scoped, tag = 'output window, operand 0, single buffered']
    #allocation3 [shape = 's32[1]{0}', space=sflag, size = 0x4, scoped, tag = 'scoped memory for tpu_custom_call.1']
    #allocation4 [shape = 'u8[8192]{0}', space=vmem, size = 0x2000, scoped, tag = 'output window, operand 1, single buffered']
    #allocation5 [shape = 's32[1]{0}', space=sflag, size = 0x4, scoped, tag = 'scoped memory for tpu_custom_call.1']
    %16 = vsyncpa [#allocation3], 0
    %17 = vsyncpa [#allocation5], 0
    // Predicated region
    $region2: #{tpu_custom_call.1} parent=1 // pred_check
      _
    $region3: #{tpu_custom_call.1} parent=1 // pred_check_branch
      %19 = sbr.rel (0) target = $region5
    $region4: #{tpu_custom_call.1} parent=1 // pred_region
      _
    $region5: #{tpu_custom_call.1} parent=1 // pred_fallthru
      _
    // Predicated region
    $region6: #{tpu_custom_call.1} parent=1 // pred_check
      _
    $region7: #{tpu_custom_call.1} parent=1 // pred_check_branch
      %21 = sbr.rel (0) target = $region9
    $region8: #{tpu_custom_call.1} parent=1 // pred_region
      _
    $region9: #{tpu_custom_call.1} parent=1 // pred_fallthru
      _
    // Predicated region
    $region10: #{tpu_custom_call.1} parent=1 // pred_check
      _
    $region11: #{tpu_custom_call.1} parent=1 // pred_check_branch
      %23 = sbr.rel (0) target = $region13
    $region12: #{tpu_custom_call.1} parent=1 // pred_region
      _
    $region13: #{tpu_custom_call.1} parent=1 // pred_fallthru
      _
    // Predicated region
    $region14: #{tpu_custom_call.1} parent=1 // pred_check
      _
    $region15: #{tpu_custom_call.1} parent=1 // pred_check_branch
      %25 = sbr.rel (0) target = $region17
    $region16: #{tpu_custom_call.1} parent=1 // pred_region
      _
    $region17: #{tpu_custom_call.1} parent=1 // pred_fallthru
      _
    // Predicated region
    $region18: #{tpu_custom_call.1} parent=1 // pred_check
      _
    $region19: #{tpu_custom_call.1} parent=1 // pred_check_branch
      %27 = sbr.rel (0) target = $region21
    $region20: #{tpu_custom_call.1} parent=1 // pred_region
      _
    $region21: #{tpu_custom_call.1} parent=1 // pred_fallthru
      _
    // Predicated region
    $region22: #{tpu_custom_call.1} parent=1 // pred_check
      _
    $region23: #{tpu_custom_call.1} parent=1 // pred_check_branch
      %29 = sbr.rel (0) target = $region25
    $region24: #{tpu_custom_call.1} parent=1 // pred_region
      _
    $region25: #{tpu_custom_call.1} parent=1 // pred_fallthru
      _
    // Predicated region
    $region26: #{tpu_custom_call.1} parent=1 // pred_check
      _
    $region27: #{tpu_custom_call.1} parent=1 // pred_check_branch
      %31 = sbr.rel (0) target = $region29
    $region28: #{tpu_custom_call.1} parent=1 // pred_region
      _
    $region29: #{tpu_custom_call.1} parent=1 // pred_fallthru
      _
    // Predicated region
    $region30: #{tpu_custom_call.1} parent=1 // pred_check
      _
    $region31: #{tpu_custom_call.1} parent=1 // pred_check_branch
      %33 = sbr.rel (0) target = $region33
    $region32: #{tpu_custom_call.1} parent=1 // pred_region
      _
    $region33: #{tpu_custom_call.1} parent=1 // pred_fallthru
      _
    // Predicated region
    $region34: #{tpu_custom_call.1} parent=1 // pred_check
      _
    $region35: #{tpu_custom_call.1} parent=1 // pred_check_branch
      %35 = sbr.rel (0) target = $region37
    $region36: #{tpu_custom_call.1} parent=1 // pred_region
      _
    $region37: #{tpu_custom_call.1} parent=1 // pred_fallthru
      _
    %v37 = vld [vmem:[%s0] sm:$0xff]
    %v38 = vld [vmem:[%s0 + $0x8] sm:$0xff]
    %v39 = vld [vmem:[%s0 + $0x10] sm:$0xff]
    %v40 = vld [vmem:[%s0 + $0x18] sm:$0xff]
    %v41 = vld [vmem:[%s1] sm:$0x1]
    %v42 = vld [vmem:[%s2] sm:$0x1]
    %vm43 = vcmask 523264
    %v44 = vsel %vm43, %v37, 0.0
    %45 = vadd.xlane.f32.xlu0 %v44
    %v46 = vpop.xlane.xlu0 %45
    %v47 = vsel %vm43, %v38, 0.0
    %48 = vadd.xlane.f32.xlu0 %v47
    %v49 = vpop.xlane.xlu0 %48
    %v50 = vsel %vm43, %v39, 0.0
    %51 = vadd.xlane.f32.xlu0 %v50
    %v52 = vpop.xlane.xlu0 %51
    %v53 = vsel %vm43, %v40, 0.0
    %54 = vadd.xlane.f32.xlu0 %v53
    %v55 = vpop.xlane.xlu0 %54
    %v56 = vrcp.pop 64.0
    %v57 = vmul.f32 %v46, %v56
    %v58 = vmul.f32 %v49, %v56
    %v59 = vmul.f32 %v52, %v56
    %v60 = vmul.f32 %v55, %v56
    %v61 = vsub.f32 %v37, %v57
    %v62 = vsub.f32 %v38, %v58
    %v63 = vsub.f32 %v39, %v59
    %v64 = vsub.f32 %v40, %v60
    %v65 = vmul.f32 %v61, %v61
    %v66 = vmul.f32 %v62, %v62
    %v67 = vmul.f32 %v63, %v63
    %v68 = vmul.f32 %v64, %v64
    %v69 = vsel %vm43, %v65, 0.0
    %70 = vadd.xlane.f32.xlu0 %v69
    %v71 = vpop.xlane.xlu0 %70
    %v72 = vsel %vm43, %v66, 0.0
    %73 = vadd.xlane.f32.xlu0 %v72
    %v74 = vpop.xlane.xlu0 %73
    %v75 = vsel %vm43, %v67, 0.0
    %76 = vadd.xlane.f32.xlu0 %v75
    %v77 = vpop.xlane.xlu0 %76
    %v78 = vsel %vm43, %v68, 0.0
    %79 = vadd.xlane.f32.xlu0 %v78
    %v80 = vpop.xlane.xlu0 %79
    %v81 = vmul.f32 %v71, %v56
    %v82 = vmul.f32 %v74, %v56
    %v83 = vmul.f32 %v77, %v56
    %v84 = vmul.f32 %v80, %v56
    %v85 = vadd.f32 %v81, 1e-05
    %v86 = vadd.f32 %v82, 1e-05
    %v87 = vadd.f32 %v83, 1e-05
    %v88 = vadd.f32 %v84, 1e-05
    %v89 = vrsqrt.pop %v85
    %v90 = vrsqrt.pop %v86
    %v91 = vrsqrt.pop %v87
    %v92 = vrsqrt.pop %v88
    %v93 = vmul.f32 %v61, %v89
    %v94 = vmul.f32 %v62, %v90
    %v95 = vmul.f32 %v63, %v91
    %v96 = vmul.f32 %v64, %v92
    %v98 = vlaneseq
    %v99 = vshrl.u32 %v98, 7
    %v100 = vsub.s32 0, %v99
    %v101 = vrot.slane %v41, %v100
    %v103 = vmul.f32 %v93, %v101
    %v104 = vmul.f32 %v94, %v101
    %v105 = vmul.f32 %v95, %v101
    %v106 = vmul.f32 %v96, %v101
    %v108 = vlaneseq
    %v109 = vshrl.u32 %v108, 7
    %v110 = vsub.s32 0, %v109
    %v111 = vrot.slane %v42, %v110
    %v113 = vadd.f32 %v103, %v111
    %v114 = vadd.f32 %v104, %v111
    %v115 = vadd.f32 %v105, %v111
    %v116 = vadd.f32 %v106, %v111
    %v117 = vld [vmem:[%s3] sm:$0x1]
    %v118 = vld [vmem:[%s4] sm:$0x1]
    %v120 = vlaneseq
    %v121 = vshrl.u32 %v120, 7
    %v122 = vsub.s32 0, %v121
    %v123 = vrot.slane %v117, %v122
    %v125 = vmul.f32 %v93, %v123
    %v126 = vmul.f32 %v94, %v123
    %v127 = vmul.f32 %v95, %v123
    %v128 = vmul.f32 %v96, %v123
    %v130 = vlaneseq
    %v131 = vshrl.u32 %v130, 7
    %v132 = vsub.s32 0, %v131
    %v133 = vrot.slane %v118, %v132
    %v135 = vadd.f32 %v125, %v133
    %v136 = vadd.f32 %v126, %v133
    %v137 = vadd.f32 %v127, %v133
    %v138 = vadd.f32 %v128, %v133
    %v139 = vpack.c.bf16 %v114, %v113
    %v140 = vpack.c.bf16 %v116, %v115
    %v141 = vld [vmem:[%s5] sm:$0xf]
    %v142 = vld [vmem:[%s5 + $0x4] sm:$0xf]
    %v143 = vld [vmem:[%s5 + $0x8] sm:$0xf]
    %v144 = vld [vmem:[%s5 + $0xc] sm:$0xf]
    %v145 = vld [vmem:[%s5 + $0x10] sm:$0xf]
    %v146 = vld [vmem:[%s5 + $0x14] sm:$0xf]
    %v147 = vld [vmem:[%s5 + $0x18] sm:$0xf]
    %v148 = vld [vmem:[%s5 + $0x1c] sm:$0xf]
    %v149 = vld [vmem:[%s6] sm:$0x1]
    %v151 = vlaneseq
    %v152 = vshrl.u32 %v151, 7
    %v153 = vsub.s32 0, %v152
    %v154 = vrot.slane %v149, %v153
    %v164 = vunpack.c.l.b16 %v141
    %v165 = vunpack.c.l.b16 %v142
    %v166 = vunpack.c.l.b16 %v143
    %v167 = vunpack.c.l.b16 %v144
    %v168 = vunpack.c.l.b16 %v145
    %v169 = vunpack.c.l.b16 %v146
    %v170 = vunpack.c.l.b16 %v147
    %v171 = vunpack.c.l.b16 %v148
    %v172 = vpack.c.b16 %v165, %v164
    %v173 = vpack.c.b16 %v167, %v166
    %v174 = vpack.c.b16 %v169, %v168
    %v175 = vpack.c.b16 %v171, %v170
    %v181 = vsel %vm43, %v139, 0
    %v184 = vsel %vm43, %v140, 0
    %186 = vmatprep.subr.bf16.mxu0 0
    %187 = vmatpush1.bf16.msra.mxu0 0
    %188 = vmatprep.subr.bf16.mxu0 0
    %189 = vmatpush1.bf16.msra.mxu0 0
    %190 = vmatprep.subr.bf16.mxu0 0
    %191 = vmatpush1.bf16.msra.mxu0 0
    %192 = vmatprep.subr.bf16.mxu0 0
    %193 = vmatpush1.bf16.msra.mxu0 0
    %194 = vmatprep.subr.bf16.mxu0 0
    %195 = vmatpush1.bf16.msra.mxu0 %v175
    %196 = vmatprep.subr.bf16.mxu0 0
    %197 = vmatpush1.bf16.msra.mxu0 %v174
    %198 = vmatprep.subr.bf16.mxu0 0
    %199 = vmatpush1.bf16.msra.mxu0 %v173
    %200 = vmatprep.subr.bf16.mxu0 0
    %201 = vmatpush1.bf16.msra.mxu0 %v172
    %202 = vmatprep.subr.bf16.mxu0 0
    %203 = vmatpush2.bf16.msra.mxu0 0
    %204 = vmatprep.subr.bf16.mxu0 0
    %205 = vmatpush2.bf16.msra.mxu0 0
    %206 = vmatprep.subr.bf16.mxu0 0
    %207 = vmatpush2.bf16.msra.mxu0 0
    %208 = vmatprep.subr.bf16.mxu0 0
    %209 = vmatpush2.bf16.msra.mxu0 0
    %210 = vmatprep.subr.bf16.mxu0 0
    %211 = vmatpush2.bf16.msra.mxu0 0
    %212 = vmatprep.subr.bf16.mxu0 0
    %213 = vmatpush2.bf16.msra.mxu0 0
    %214 = vmatprep.subr.bf16.mxu0 0
    %215 = vmatpush2.bf16.msra.mxu0 0
    %216 = vmatprep.subr.bf16.mxu0 0
    %217 = vmatpush2.bf16.msra.mxu0 0
    %218 = vmatprep.mubr.bf16.mxu0 0
    %219 = vmatmul.mubr.bf16.gmra.mxu0 %v181
    %v220 = vpop.f32.mrf.mxu0
    %v221 = vadd.f32 %v154, %v220
    %v222 = vpop.f32.mrf.mxu0
    %v223 = vpop.f32.mrf.mxu0
    %v224 = vadd.f32 %v154, %v223
    %v225 = vpop.f32.mrf.mxu0
    %226 = vmatprep.mubr.bf16.mxu0 0
    %227 = vmatmul.mubr.bf16.gmra.mxu0 %v184
    %v228 = vpop.f32.mrf.mxu0
    %v229 = vadd.f32 %v154, %v228
    %v230 = vpop.f32.mrf.mxu0
    %v231 = vpop.f32.mrf.mxu0
    %v232 = vadd.f32 %v154, %v231
    %v233 = vpop.f32.mrf.mxu0
    %234 = vdwg.mxu0
    %v235 = vpack.c.bf16 %v136, %v135
    %v236 = vpack.c.bf16 %v138, %v137
    %v237 = vld [vmem:[%s7] sm:$0xf]
    %v238 = vld [vmem:[%s7 + $0x4] sm:$0xf]
    %v239 = vld [vmem:[%s7 + $0x8] sm:$0xf]
    %v240 = vld [vmem:[%s7 + $0xc] sm:$0xf]
    %v241 = vld [vmem:[%s7 + $0x10] sm:$0xf]
    %v242 = vld [vmem:[%s7 + $0x14] sm:$0xf]
    %v243 = vld [vmem:[%s7 + $0x18] sm:$0xf]
    %v244 = vld [vmem:[%s7 + $0x1c] sm:$0xf]
    %v245 = vld [vmem:[%s8] sm:$0x1]
    %v247 = vlaneseq
    %v248 = vshrl.u32 %v247, 7
    %v249 = vsub.s32 0, %v248
    %v250 = vrot.slane %v245, %v249
    %v260 = vunpack.c.l.b16 %v237
    %v261 = vunpack.c.l.b16 %v238
    %v262 = vunpack.c.l.b16 %v239
    %v263 = vunpack.c.l.b16 %v240
    %v264 = vunpack.c.l.b16 %v241
    %v265 = vunpack.c.l.b16 %v242
    %v266 = vunpack.c.l.b16 %v243
    %v267 = vunpack.c.l.b16 %v244
    %v268 = vpack.c.b16 %v261, %v260
    %v269 = vpack.c.b16 %v263, %v262
    %v270 = vpack.c.b16 %v265, %v264
    %v271 = vpack.c.b16 %v267, %v266
    %v277 = vsel %vm43, %v235, 0
    %v280 = vsel %vm43, %v236, 0
    %282 = vmatprep.subr.bf16.mxu0 0
    %283 = vmatpush1.bf16.msra.mxu0 0
    %284 = vmatprep.subr.bf16.mxu0 0
    %285 = vmatpush1.bf16.msra.mxu0 0
    %286 = vmatprep.subr.bf16.mxu0 0
    %287 = vmatpush1.bf16.msra.mxu0 0
    %288 = vmatprep.subr.bf16.mxu0 0
    %289 = vmatpush1.bf16.msra.mxu0 0
    %290 = vmatprep.subr.bf16.mxu0 0
    %291 = vmatpush1.bf16.msra.mxu0 %v271
    %292 = vmatprep.subr.bf16.mxu0 0
    %293 = vmatpush1.bf16.msra.mxu0 %v270
    %294 = vmatprep.subr.bf16.mxu0 0
    %295 = vmatpush1.bf16.msra.mxu0 %v269
    %296 = vmatprep.subr.bf16.mxu0 0
    %297 = vmatpush1.bf16.msra.mxu0 %v268
    %298 = vmatprep.subr.bf16.mxu0 0
    %299 = vmatpush2.bf16.msra.mxu0 0
    %300 = vmatprep.subr.bf16.mxu0 0
    %301 = vmatpush2.bf16.msra.mxu0 0
    %302 = vmatprep.subr.bf16.mxu0 0
    %303 = vmatpush2.bf16.msra.mxu0 0
    %304 = vmatprep.subr.bf16.mxu0 0
    %305 = vmatpush2.bf16.msra.mxu0 0
    %306 = vmatprep.subr.bf16.mxu0 0
    %307 = vmatpush2.bf16.msra.mxu0 0
    %308 = vmatprep.subr.bf16.mxu0 0
    %309 = vmatpush2.bf16.msra.mxu0 0
    %310 = vmatprep.subr.bf16.mxu0 0
    %311 = vmatpush2.bf16.msra.mxu0 0
    %312 = vmatprep.subr.bf16.mxu0 0
    %313 = vmatpush2.bf16.msra.mxu0 0
    %314 = vmatprep.mubr.bf16.mxu0 0
    %315 = vmatmul.mubr.bf16.gmra.mxu0 %v277
    %v316 = vpop.f32.mrf.mxu0
    %v317 = vadd.f32 %v250, %v316
    %v318 = vpop.f32.mrf.mxu0
    %v319 = vpop.f32.mrf.mxu0
    %v320 = vadd.f32 %v250, %v319
    %v321 = vpop.f32.mrf.mxu0
    %322 = vmatprep.mubr.bf16.mxu0 0
    %323 = vmatmul.mubr.bf16.gmra.mxu0 %v280
    %v324 = vpop.f32.mrf.mxu0
    %v325 = vadd.f32 %v250, %v324
    %v326 = vpop.f32.mrf.mxu0
    %v327 = vpop.f32.mrf.mxu0
    %v328 = vadd.f32 %v250, %v327
    %v329 = vpop.f32.mrf.mxu0
    %330 = vdwg.mxu0
    %v331 = vpack.c.bf16 %v224, %v221
    %v332 = vpack.c.bf16 %v232, %v229
    %v335 = vunpack.c.l.b16 %v331
    %v336 = vunpack.c.h.b16 %v331
    %v337 = vunpack.c.l.b16 %v332
    %v338 = vunpack.c.h.b16 %v332
    %v339 = vpack.c.b16 %v335, %v335
    %v340 = vpack.c.b16 %v336, %v336
    %v341 = vpack.c.b16 %v337, %v337
    %v342 = vpack.c.b16 %v338, %v338
    %vm347 = vcmask 257024
    %348 = vst.msk [vmem:[#allocation2] sm:$0xf] %vm347, %v339
    %349 = vst.msk [vmem:[#allocation2 + $0x4] sm:$0xf] %vm347, %v340
    %350 = vst.msk [vmem:[#allocation2 + $0x8] sm:$0xf] %vm347, %v341
    %351 = vst.msk [vmem:[#allocation2 + $0xc] sm:$0xf] %vm347, %v342
    %v352 = vpack.c.bf16 %v320, %v317
    %v353 = vpack.c.bf16 %v328, %v325
    %v356 = vunpack.c.l.b16 %v352
    %v357 = vunpack.c.h.b16 %v352
    %v358 = vunpack.c.l.b16 %v353
    %v359 = vunpack.c.h.b16 %v353
    %v360 = vpack.c.b16 %v356, %v356
    %v361 = vpack.c.b16 %v357, %v357
    %v362 = vpack.c.b16 %v358, %v358
    %v363 = vpack.c.b16 %v359, %v359
    %368 = vst.msk [vmem:[#allocation4] sm:$0xf] %vm347, %v360
    %369 = vst.msk [vmem:[#allocation4 + $0x4] sm:$0xf] %vm347, %v361
    %370 = vst.msk [vmem:[#allocation4 + $0x8] sm:$0xf] %vm347, %v362
    %371 = vst.msk [vmem:[#allocation4 + $0xc] sm:$0xf] %vm347, %v363
    // Predicated region
    $region38: #{tpu_custom_call.1} parent=1 // pred_check
      _
    $region39: #{tpu_custom_call.1} parent=1 // pred_check_branch
      %373 = sbr.rel (0) target = $region41
    $region40: #{tpu_custom_call.1} parent=1 // pred_region
      %s375 = ssub.s32 256, 256
      %376 = vsyncadd [#allocation3], %s375
      %s377 = sshll.u32 [#allocation2], 4
      %s378 = int_to_ptr.vmem [resolvable:$true] %s377
      %383 = dma.vmem_to_hbm [thread:$0]  %s378, 256, %s9, [#allocation3], 64, 64, 4
    $region41: #{tpu_custom_call.1} parent=1 // pred_fallthru
      _
    // Predicated region
    $region42: #{tpu_custom_call.1} parent=1 // pred_check
      _
    $region43: #{tpu_custom_call.1} parent=1 // pred_check_branch
      %385 = sbr.rel (0) target = $region45
    $region44: #{tpu_custom_call.1} parent=1 // pred_region
      %s387 = ssub.s32 256, 256
      %388 = vsyncadd [#allocation5], %s387
      %s389 = sshll.u32 [#allocation4], 4
      %s390 = int_to_ptr.vmem [resolvable:$true] %s389
      %395 = dma.vmem_to_hbm [thread:$0]  %s390, 256, %s10, [#allocation5], 64, 64, 4
    $region45: #{tpu_custom_call.1} parent=1 // pred_fallthru
      _
    // Predicated region
    $region46: #{tpu_custom_call.1} parent=1 // pred_check
      _
    $region47: #{tpu_custom_call.1} parent=1 // pred_check_branch
      %397 = sbr.rel (0) target = $region49
    $region48: #{tpu_custom_call.1} parent=1 // pred_region
      %398 = dma.done [#allocation3], 256
    $region49: #{tpu_custom_call.1} parent=1 // pred_fallthru
      _
    // Predicated region
    $region50: #{tpu_custom_call.1} parent=1 // pred_check
      _
    $region51: #{tpu_custom_call.1} parent=1 // pred_check_branch
      %400 = sbr.rel (0) target = $region53
    $region52: #{tpu_custom_call.1} parent=1 // pred_region
      %401 = dma.done [#allocation5], 256
    $region53: #{tpu_custom_call.1} parent=1 // pred_fallthru
      _
    %402 = vsyncpa [#allocation3], 1
    %403 = vsyncpa [#allocation5], 1

</llo_original>
